<compile_context>
chip_gen: v7x
topology: tpu7x:2x2x1
jax: 0.10.0
libtpu: 0.0.40
codegen_flags: <defaults>
</compile_context>

<pallas_src>
import math

import jax
import jax.numpy as jnp
from jax.experimental import pallas as pl
from jax.experimental.pallas import tpu as pltpu

LANE = 128
SUBLANE = 8


def _round_up(n, m):
    return ((n + m - 1) // m) * m


def _choose_batch_tile(batch):
    # >=256 rows keeps the MXU busy and amortizes per-grid-step overhead on
    # v6e/v7x; for tiny batches use one sublane-aligned tile (no wasted steps).
    if batch >= 256:
        return 256
    return max(SUBLANE, _round_up(batch, SUBLANE))


def _make_fused_fc_kernel(num_layers):
    """Kernel computing sigmoid(... sigmoid(x @ W1 + b1) ... @ Wn + bn).

    Ref order: (x_ref, w1_ref, b1_ref, ..., wn_ref, bn_ref, o_ref).
    The Python loop unrolls at trace time so the LLO scheduler sees the whole
    fused body (two dependent matmuls + sigmoids) in one block.
    """

    def kernel(x_ref, *refs):
        o_ref = refs[-1]
        param_refs = refs[:-1]
        h = x_ref[...]
        for i in range(num_layers):
            w = param_refs[2 * i][...]
            b = param_refs[2 * i + 1][...]           # (1, out) -> broadcasts over batch
            y = jnp.dot(h, w, preferred_element_type=jnp.float32)
            h = jax.nn.sigmoid(y + b)
        o_ref[...] = h.astype(o_ref.dtype)

    return kernel


def fused_fc_forward(x2d, params):
    """Single pallas_call for the whole Linear->Sigmoid stack.

    Grid runs over batch tiles only; weights/biases are whole-array VMEM
    blocks with constant index_maps (fetched once, resident for all steps).
    The final layer is padded to a 128-lane-dense output and sliced outside.
    """
    b, k = x2d.shape
    num_layers = len(params)
    out_n = params[-1][0].shape[1]
    out_n_pad = _round_up(out_n, LANE)

    tb = _choose_batch_tile(b)
    b_pad = _round_up(b, tb)
    grid = (b_pad // tb,)

    if b_pad != b:
        x2d = jnp.pad(x2d, ((0, b_pad - b), (0, 0)))

    # Zero-pad the last layer's output columns to a lane-dense width.
    w_last, bias_last = params[-1]
    if out_n_pad != out_n:
        w_last = jnp.pad(w_last, ((0, 0), (0, out_n_pad - out_n)))
        bias_last = jnp.pad(bias_last, ((0, 0), (0, out_n_pad - out_n)))
    params = list(params[:-1]) + [(w_last, bias_last)]

    flat_args = [x2d]
    in_specs = [pl.BlockSpec((tb, k), lambda i: (i, 0))]
    for w, bias in params:
        flat_args.extend([w, bias])
        in_specs.append(pl.BlockSpec(w.shape, lambda i: (0, 0)))      # resident
        in_specs.append(pl.BlockSpec(bias.shape, lambda i: (0, 0)))   # resident

    out_padded = pl.pallas_call(
        _make_fused_fc_kernel(num_layers),
        out_shape=jax.ShapeDtypeStruct((b_pad, out_n_pad), x2d.dtype),
        grid=grid,
        in_specs=in_specs,
        out_specs=pl.BlockSpec((tb, out_n_pad), lambda i: (i, 0)),
        compiler_params=pltpu.CompilerParams(
            dimension_semantics=("parallel",)),
    )(*flat_args)

    return out_padded[:b, :out_n]


def init_fc_params(key, in_features, layer_sizes, dtype=jnp.float32):
    """Deterministic PyTorch-like init: U(-1/sqrt(fan_in), 1/sqrt(fan_in))."""
    sizes = [in_features] + list(layer_sizes)
    params = []
    for i in range(len(sizes) - 1):
        fan_in, fan_out = sizes[i], sizes[i + 1]
        key, kw, kb = jax.random.split(key, 3)
        bound = 1.0 / math.sqrt(fan_in)
        w = jax.random.uniform(kw, (fan_in, fan_out), dtype, -bound, bound)
        b = jax.random.uniform(kb, (1, fan_out), dtype, -bound, bound)
        params.append((w, b))
    return params


@jax.jit
def fc_layer_forward(x, params):
    # Matches FC_Layer.forward: flatten everything but the batch dim (dim 0),
    # then apply the fused (Linear -> Sigmoid)* stack in one kernel.
    batch = x.shape[0]
    x2d = jnp.reshape(x, (batch, -1))
    return fused_fc_forward(x2d, params)


def _reference_forward(x, params):
    # Pure-JAX reference for correctness checking.
    h = jnp.reshape(x, (x.shape[0], -1))
    for w, b in params:
        h = jax.nn.sigmoid(h @ w + b)
    return h


if __name__ == "__main__":
    key = jax.random.PRNGKey(0)
    k_in, k_params, k_big = jax.random.split(key, 3)

    in_features = 4 * 4 * 4
    layer_sizes = [32, 16]
    params = init_fc_params(k_params, in_features, layer_sizes)

    # Small NCHW input consistent with FC_Layer: (batch=2, C=4, H=4, W=4) -> 64 features.
    x = jax.random.normal(k_in, (2, 4, 4, 4), dtype=jnp.float32)
    out = fc_layer_forward(x, params)
    jax.block_until_ready(out)
    assert out.shape == (2, layer_sizes[-1])
    assert bool(jnp.all((out >= 0.0) & (out <= 1.0)))
    ref = _reference_forward(x, params)
    assert bool(jnp.allclose(out, ref, rtol=1e-5, atol=1e-5))

    # Larger batch exercising the batch grid (tb=256, grid=(2,)) and the
    # "parallel" dimension semantics (two TCs on v7x).
    x_big = jax.random.normal(k_big, (384, 4, 4, 4), dtype=jnp.float32)
    out_big = fc_layer_forward(x_big, params)
    jax.block_until_ready(out_big)
    assert out_big.shape == (384, layer_sizes[-1])
    ref_big = _reference_forward(x_big, params)
    assert bool(jnp.allclose(out_big, ref_big, rtol=1e-5, atol=1e-5))

    print("KERNEL_OK")
</pallas_src>

<mosaic_0001>
module attributes {stable_mosaic.version = 11 : i64} {
  func.func @kernel(%arg0: i32, %arg1: memref<8x64xf32, #tpu.memory_space<vmem>>, %arg2: memref<64x32xf32, #tpu.memory_space<vmem>>, %arg3: memref<1x32xf32, #tpu.memory_space<vmem>>, %arg4: memref<32x128xf32, #tpu.memory_space<vmem>>, %arg5: memref<1x128xf32, #tpu.memory_space<vmem>>, %arg6: memref<8x128xf32, #tpu.memory_space<vmem>>) attributes {dimension_semantics = [#tpu.dimension_semantics<parallel>], iteration_bounds = array<i64: 1>, scalar_prefetch = 0 : i64, scratch_operands = 0 : i64, tpu.core_type = #tpu.core_type<tc>, window_params = [{transform_indices = @transform_0, window_bounds = array<i64: 8, 64>}, {pipeline_mode = #tpu.pipeline_mode<synchronous>, transform_indices = @transform_1, window_bounds = array<i64: 64, 32>}, {pipeline_mode = #tpu.pipeline_mode<synchronous>, transform_indices = @transform_2, window_bounds = array<i64: 1, 32>}, {pipeline_mode = #tpu.pipeline_mode<synchronous>, transform_indices = @transform_3, window_bounds = array<i64: 32, 128>}, {pipeline_mode = #tpu.pipeline_mode<synchronous>, transform_indices = @transform_4, window_bounds = array<i64: 1, 128>}, {transform_indices = @transform_5, window_bounds = array<i64: 8, 128>}]} {
    %c0 = arith.constant 0 : index
    %c0_0 = arith.constant 0 : index
    %0 = vector.load %arg1[%c0, %c0_0] : memref<8x64xf32, #tpu.memory_space<vmem>>, vector<8x64xf32>
    %c0_1 = arith.constant 0 : index
    %c0_2 = arith.constant 0 : index
    %1 = vector.load %arg2[%c0_1, %c0_2] : memref<64x32xf32, #tpu.memory_space<vmem>>, vector<64x32xf32>
    %c0_3 = arith.constant 0 : index
    %c0_4 = arith.constant 0 : index
    %2 = vector.load %arg3[%c0_3, %c0_4] : memref<1x32xf32, #tpu.memory_space<vmem>>, vector<1x32xf32>
    %cst = arith.constant dense<0.000000e+00> : vector<8x32xf32>
    %3 = tpu.matmul %0, %1, %cst {dimension_numbers = #tpu.dot_dimension_numbers<[1], [0], [0], [1], [0, 0, 1, 1], [], []>} : vector<8x64xf32>, vector<64x32xf32>, vector<8x32xf32> -> vector<8x32xf32>
    %4 = vector.broadcast %2 : vector<1x32xf32> to vector<8x32xf32>
    %5 = arith.addf %3, %4 : vector<8x32xf32>
    %6 = arith.negf %5 : vector<8x32xf32>
    %7 = math.exp %6 : vector<8x32xf32>
    %cst_5 = arith.constant 1.000000e+00 : f32
    %8 = vector.broadcast %cst_5 : f32 to vector<8x32xf32>
    %9 = arith.addf %8, %7 : vector<8x32xf32>
    %10 = arith.divf %8, %9 : vector<8x32xf32>
    %c0_6 = arith.constant 0 : index
    %c0_7 = arith.constant 0 : index
    %11 = vector.load %arg4[%c0_6, %c0_7] : memref<32x128xf32, #tpu.memory_space<vmem>>, vector<32x128xf32>
    %c0_8 = arith.constant 0 : index
    %c0_9 = arith.constant 0 : index
    %12 = vector.load %arg5[%c0_8, %c0_9] : memref<1x128xf32, #tpu.memory_space<vmem>>, vector<1x128xf32>
    %cst_10 = arith.constant dense<0.000000e+00> : vector<8x128xf32>
    %13 = tpu.matmul %10, %11, %cst_10 {dimension_numbers = #tpu.dot_dimension_numbers<[1], [0], [0], [1], [0, 0, 1, 1], [], []>} : vector<8x32xf32>, vector<32x128xf32>, vector<8x128xf32> -> vector<8x128xf32>
    %14 = vector.broadcast %12 : vector<1x128xf32> to vector<8x128xf32>
    %15 = arith.addf %13, %14 : vector<8x128xf32>
    %16 = arith.negf %15 : vector<8x128xf32>
    %17 = math.exp %16 : vector<8x128xf32>
    %cst_11 = arith.constant 1.000000e+00 : f32
    %18 = vector.broadcast %cst_11 : f32 to vector<8x128xf32>
    %19 = arith.addf %18, %17 : vector<8x128xf32>
    %20 = arith.divf %18, %19 : vector<8x128xf32>
    %c0_12 = arith.constant 0 : index
    %c0_13 = arith.constant 0 : index
    %21 = vector.load %arg6[%c0_12, %c0_13] : memref<8x128xf32, #tpu.memory_space<vmem>>, vector<8x128xf32>
    tpu.vector_store %arg6[%c0_12, %c0_13], %20 {strides = array<i32>} : memref<8x128xf32, #tpu.memory_space<vmem>>, vector<8x128xf32>,
    return
  }
  func.func @transform_0(%arg0: i32) -> (i32, i32) {
    %c0_i32 = arith.constant 0 : i32
    %c0_i32_0 = arith.constant 0 : i32
    return %arg0, %c0_i32 : i32, i32
  }
  func.func @transform_1(%arg0: i32) -> (i32, i32) {
    %c0_i32 = arith.constant 0 : i32
    %c0_i32_0 = arith.constant 0 : i32
    %c0_i32_1 = arith.constant 0 : i32
    return %c0_i32, %c0_i32_0 : i32, i32
  }
  func.func @transform_2(%arg0: i32) -> (i32, i32) {
    %c0_i32 = arith.constant 0 : i32
    %c0_i32_0 = arith.constant 0 : i32
    %c0_i32_1 = arith.constant 0 : i32
    return %c0_i32, %c0_i32_0 : i32, i32
  }
  func.func @transform_3(%arg0: i32) -> (i32, i32) {
    %c0_i32 = arith.constant 0 : i32
    %c0_i32_0 = arith.constant 0 : i32
    %c0_i32_1 = arith.constant 0 : i32
    return %c0_i32, %c0_i32_0 : i32, i32
  }
  func.func @transform_4(%arg0: i32) -> (i32, i32) {
    %c0_i32 = arith.constant 0 : i32
    %c0_i32_0 = arith.constant 0 : i32
    %c0_i32_1 = arith.constant 0 : i32
    return %c0_i32, %c0_i32_0 : i32, i32
  }
  func.func @transform_5(%arg0: i32) -> (i32, i32) {
    %c0_i32 = arith.constant 0 : i32
    %c0_i32_0 = arith.constant 0 : i32
    return %arg0, %c0_i32 : i32, i32
  }
}

</mosaic_0001>

<llo_original>
// kernel: fc_layer_forward.1
$region0: #{fc_layer_forward.1}
  #allocation0 [shape = 'u32[]', space=smem, size = 0x4, offset = 0x4, fixed_abs, tag = 'smem constant byte address 0x4 - core index']
  #allocation1 [shape = 'u32[144,128]{1,0:T(1,128)}', space=vmem, size = 0x12000, scoped, tag = 'internal scratch']
  %s0 = inlined_call_operand.vmem [shape: f32[8,64], index: 0, kind: input, shape index: {}]
  %s1 = inlined_call_operand.vmem [shape: f32[64,32], index: 1, kind: input, shape index: {}]
  %s2 = inlined_call_operand.vmem [shape: f32[1,32], index: 2, kind: input, shape index: {}]
  %s3 = inlined_call_operand.vmem [shape: f32[32,128], index: 3, kind: input, shape index: {}]
  %s4 = inlined_call_operand.vmem [shape: f32[1,128], index: 4, kind: input, shape index: {}]
  %s5 = inlined_call_operand.vmem [shape: f32[8,128], index: 5, kind: output, shape index: {}]
  %s6 = sld [smem:[#allocation0]]
  $region30: #{fc_layer_forward.1} parent=0
    _
  %s8 = ssub.s32 1, %s6
  %s9 = scalar_select 0, %s8, %s6
  // Predicated region
  $region2: #{fc_layer_forward.1} parent=0 // pred_check
    _
  $region3: #{fc_layer_forward.1} parent=0 // pred_check_branch
    %11 = sbr.rel (0) target = $region5
  $region4: #{fc_layer_forward.1} parent=0 // pred_region
    _
  $region5: #{fc_layer_forward.1} parent=0 // pred_fallthru
    _
  // Predicated region
  $region6: #{fc_layer_forward.1} parent=0 // pred_check
    _
  $region7: #{fc_layer_forward.1} parent=0 // pred_check_branch
    %13 = sbr.rel (0) target = $region9
  $region8: #{fc_layer_forward.1} parent=0 // pred_region
    _
  $region9: #{fc_layer_forward.1} parent=0 // pred_fallthru
    _
  // Predicated region
  $region10: #{fc_layer_forward.1} parent=0 // pred_check
    _
  $region11: #{fc_layer_forward.1} parent=0 // pred_check_branch
    %15 = sbr.rel (0) target = $region13
  $region12: #{fc_layer_forward.1} parent=0 // pred_region
    _
  $region13: #{fc_layer_forward.1} parent=0 // pred_fallthru
    _
  // Predicated region
  $region14: #{fc_layer_forward.1} parent=0 // pred_check
    _
  $region15: #{fc_layer_forward.1} parent=0 // pred_check_branch
    %17 = sbr.rel (0) target = $region17
  $region16: #{fc_layer_forward.1} parent=0 // pred_region
    _
  $region17: #{fc_layer_forward.1} parent=0 // pred_fallthru
    _
  // Predicated region
  $region18: #{fc_layer_forward.1} parent=0 // pred_check
    _
  $region19: #{fc_layer_forward.1} parent=0 // pred_check_branch
    %19 = sbr.rel (0) target = $region21
  $region20: #{fc_layer_forward.1} parent=0 // pred_region
    _
  $region21: #{fc_layer_forward.1} parent=0 // pred_fallthru
    _
  %v20 = vld [vmem:[%s0] sm:$0xff]
  %v21 = vld [vmem:[%s1] sm:$0xff]
  %v22 = vld [vmem:[%s1 + $0x8] sm:$0xff]
  %v23 = vld [vmem:[%s1 + $0x10] sm:$0xff]
  %v24 = vld [vmem:[%s1 + $0x18] sm:$0xff]
  %v25 = vld [vmem:[%s1 + $0x20] sm:$0xff]
  %v26 = vld [vmem:[%s1 + $0x28] sm:$0xff]
  %v27 = vld [vmem:[%s1 + $0x30] sm:$0xff]
  %v28 = vld [vmem:[%s1 + $0x38] sm:$0xff]
  %v29 = vld [vmem:[%s2] sm:$0x1]
  %v31 = vlaneseq
  %v32 = vshrl.u32 %v31, 7
  %v33 = vsub.s32 0, %v32
  %v34 = vrot.slane %v29, %v33
  %vm36 = vcmask 523264
  %v38 = vsel %vm36, %v20, 0
  %40 = vmatprep.subr.mxu0 0.0
  %41 = vmatpush1.msra.mxu0 %v21
  %42 = vmatprep.subr.mxu0 0.0
  %43 = vmatpush1.msra.mxu0 %v22
  %44 = vmatprep.subr.mxu0 0.0
  %45 = vmatpush1.msra.mxu0 %v23
  %46 = vmatprep.subr.mxu0 0.0
  %47 = vmatpush1.msra.mxu0 %v24
  %48 = vmatprep.subr.mxu0 0.0
  %49 = vmatpush1.msra.mxu0 %v25
  %50 = vmatprep.subr.mxu0 0.0
  %51 = vmatpush1.msra.mxu0 %v26
  %52 = vmatprep.subr.mxu0 0.0
  %53 = vmatpush1.msra.mxu0 %v27
  %54 = vmatprep.subr.mxu0 0.0
  %55 = vmatpush1.msra.mxu0 %v28
  %56 = vmatprep.subr.mxu0 0.0
  %57 = vmatpush1.msra.mxu0 0.0
  %58 = vmatprep.subr.mxu0 0.0
  %59 = vmatpush1.msra.mxu0 0.0
  %60 = vmatprep.subr.mxu0 0.0
  %61 = vmatpush1.msra.mxu0 0.0
  %62 = vmatprep.subr.mxu0 0.0
  %63 = vmatpush1.msra.mxu0 0.0
  %64 = vmatprep.subr.mxu0 0.0
  %65 = vmatpush1.msra.mxu0 0.0
  %66 = vmatprep.subr.mxu0 0.0
  %67 = vmatpush1.msra.mxu0 0.0
  %68 = vmatprep.subr.mxu0 0.0
  %69 = vmatpush1.msra.mxu0 0.0
  %70 = vmatprep.subr.mxu0 0.0
  %71 = vmatpush1.msra.mxu0 0.0
  %72 = vmatprep.subr.mxu0 0.0
  %73 = vmatpush1.msra.mxu0 0.0
  %74 = vmatprep.subr.mxu0 0.0
  %75 = vmatpush1.msra.mxu0 0.0
  %76 = vmatprep.subr.mxu0 0.0
  %77 = vmatpush1.msra.mxu0 0.0
  %78 = vmatprep.subr.mxu0 0.0
  %79 = vmatpush1.msra.mxu0 0.0
  %80 = vmatprep.subr.mxu0 0.0
  %81 = vmatpush1.msra.mxu0 0.0
  %82 = vmatprep.subr.mxu0 0.0
  %83 = vmatpush1.msra.mxu0 0.0
  %84 = vmatprep.subr.mxu0 0.0
  %85 = vmatpush1.msra.mxu0 0.0
  %86 = vmatprep.subr.mxu0 0.0
  %87 = vmatpush1.msra.mxu0 0.0
  %88 = vmatprep.subr.mxu0 0.0
  %89 = vmatpush1.msra.mxu0 0.0
  %90 = vmatprep.subr.mxu0 0.0
  %91 = vmatpush1.msra.mxu0 0.0
  %92 = vmatprep.subr.mxu0 0.0
  %93 = vmatpush1.msra.mxu0 0.0
  %94 = vmatprep.subr.mxu0 0.0
  %95 = vmatpush1.msra.mxu0 0.0
  %96 = vmatprep.subr.mxu0 0.0
  %97 = vmatpush1.msra.mxu0 0.0
  %98 = vmatprep.subr.mxu0 0.0
  %99 = vmatpush1.msra.mxu0 0.0
  %100 = vmatprep.subr.mxu0 0.0
  %101 = vmatpush1.msra.mxu0 0.0
  %102 = vmatprep.subr.mxu0 0.0
  %103 = vmatpush1.msra.mxu0 0.0
  %104 = vmatprep.mubr.f32.mxu0 0.0
  %105 = vmatmul.mubr.f32.gmra.mrb[0].mxu0 %v38
  %v106 = vpop.f32.mrb[0].mxu0
  %v107 = vadd.f32 %v34, %v106
  %v108 = vpop.f32.mrb[0].mxu0
  %109 = vdwg.mxu0
  %v110 = vxor.u32 %v107, 2147483648
  %v111 = vmul.f32 %v110, 1.442695
  %v112 = vpow.pop %v111
  %v113 = vadd.f32 %v112, 1.0
  %v114 = vrcp.pop %v113
  %v115 = vmul.f32 1.0, %v114
  %v116 = vld [vmem:[%s3] sm:$0xff]
  %v117 = vld [vmem:[%s3 + $0x8] sm:$0xff]
  %v118 = vld [vmem:[%s3 + $0x10] sm:$0xff]
  %v119 = vld [vmem:[%s3 + $0x18] sm:$0xff]
  %v120 = vld [vmem:[%s4] sm:$0x1]
  %v122 = vlaneseq
  %v123 = vshrl.u32 %v122, 7
  %v124 = vsub.s32 0, %v123
  %v125 = vrot.slane %v120, %v124
  %vm127 = vcmask 261120
  %v129 = vsel %vm127, %v115, 0
  %131 = vmatprep.subr.mxu0 0.0
  %132 = vmatpush1.msra.mxu0 %v116
  %133 = vmatprep.subr.mxu0 0.0
  %134 = vmatpush1.msra.mxu0 %v117
  %135 = vmatprep.subr.mxu0 0.0
  %136 = vmatpush1.msra.mxu0 %v118
  %137 = vmatprep.subr.mxu0 0.0
  %138 = vmatpush1.msra.mxu0 %v119
  %139 = vmatprep.subr.mxu0 0.0
  %140 = vmatpush1.msra.mxu0 0.0
  %141 = vmatprep.subr.mxu0 0.0
  %142 = vmatpush1.msra.mxu0 0.0
  %143 = vmatprep.subr.mxu0 0.0
  %144 = vmatpush1.msra.mxu0 0.0
  %145 = vmatprep.subr.mxu0 0.0
  %146 = vmatpush1.msra.mxu0 0.0
  %147 = vmatprep.subr.mxu0 0.0
  %148 = vmatpush1.msra.mxu0 0.0
  %149 = vmatprep.subr.mxu0 0.0
  %150 = vmatpush1.msra.mxu0 0.0
  %151 = vmatprep.subr.mxu0 0.0
  %152 = vmatpush1.msra.mxu0 0.0
  %153 = vmatprep.subr.mxu0 0.0
  %154 = vmatpush1.msra.mxu0 0.0
  %155 = vmatprep.subr.mxu0 0.0
  %156 = vmatpush1.msra.mxu0 0.0
  %157 = vmatprep.subr.mxu0 0.0
  %158 = vmatpush1.msra.mxu0 0.0
  %159 = vmatprep.subr.mxu0 0.0
  %160 = vmatpush1.msra.mxu0 0.0
  %161 = vmatprep.subr.mxu0 0.0
  %162 = vmatpush1.msra.mxu0 0.0
  %163 = vmatprep.subr.mxu0 0.0
  %164 = vmatpush1.msra.mxu0 0.0
  %165 = vmatprep.subr.mxu0 0.0
  %166 = vmatpush1.msra.mxu0 0.0
  %167 = vmatprep.subr.mxu0 0.0
  %168 = vmatpush1.msra.mxu0 0.0
  %169 = vmatprep.subr.mxu0 0.0
  %170 = vmatpush1.msra.mxu0 0.0
  %171 = vmatprep.subr.mxu0 0.0
  %172 = vmatpush1.msra.mxu0 0.0
  %173 = vmatprep.subr.mxu0 0.0
  %174 = vmatpush1.msra.mxu0 0.0
  %175 = vmatprep.subr.mxu0 0.0
  %176 = vmatpush1.msra.mxu0 0.0
  %177 = vmatprep.subr.mxu0 0.0
  %178 = vmatpush1.msra.mxu0 0.0
  %179 = vmatprep.subr.mxu0 0.0
  %180 = vmatpush1.msra.mxu0 0.0
  %181 = vmatprep.subr.mxu0 0.0
  %182 = vmatpush1.msra.mxu0 0.0
  %183 = vmatprep.subr.mxu0 0.0
  %184 = vmatpush1.msra.mxu0 0.0
  %185 = vmatprep.subr.mxu0 0.0
  %186 = vmatpush1.msra.mxu0 0.0
  %187 = vmatprep.subr.mxu0 0.0
  %188 = vmatpush1.msra.mxu0 0.0
  %189 = vmatprep.subr.mxu0 0.0
  %190 = vmatpush1.msra.mxu0 0.0
  %191 = vmatprep.subr.mxu0 0.0
  %192 = vmatpush1.msra.mxu0 0.0
  %193 = vmatprep.subr.mxu0 0.0
  %194 = vmatpush1.msra.mxu0 0.0
  %195 = vmatprep.mubr.f32.mxu0 0.0
  %196 = vmatmul.mubr.f32.gmra.mrb[0].mxu0 %v129
  %v197 = vpop.f32.mrb[0].mxu0
  %v198 = vadd.f32 %v125, %v197
  %v199 = vpop.f32.mrb[0].mxu0
  %200 = vdwg.mxu0
  %v201 = vxor.u32 %v198, 2147483648
  %v202 = vmul.f32 %v201, 1.442695
  %v203 = vpow.pop %v202
  %v204 = vadd.f32 %v203, 1.0
  %v205 = vrcp.pop %v204
  %v206 = vmul.f32 1.0, %v205
  %207 = vst [vmem:[%s5] sm:$0xff] %v206
  // Predicated region
  $region22: #{fc_layer_forward.1} parent=0 // pred_check
    _
  $region23: #{fc_layer_forward.1} parent=0 // pred_check_branch
    %209 = sbr.rel (0) target = $region25
  $region24: #{fc_layer_forward.1} parent=0 // pred_region
    _
  $region25: #{fc_layer_forward.1} parent=0 // pred_fallthru
    _
  // Predicated region
  $region26: #{fc_layer_forward.1} parent=0 // pred_check
    _
  $region27: #{fc_layer_forward.1} parent=0 // pred_check_branch
    %211 = sbr.rel (0) target = $region29
  $region28: #{fc_layer_forward.1} parent=0 // pred_region
    _
  $region29: #{fc_layer_forward.1} parent=0 // pred_fallthru
    _

</llo_original>
